<compile_context>
chip_gen: v5e
topology: v5e:2x2
jax: 0.10.0
libtpu: 0.0.40
codegen_flags: <defaults>
</compile_context>

<pallas_src>
import functools

import jax
import jax.numpy as jnp
import numpy as np
from jax.experimental import pallas as pl
from jax.experimental.pallas import tpu as pltpu


def _ce_partial_kernel(logits_ref, targets_ref, out_ref, *, hw):
    """Softmax cross-entropy, lane-parallel partial sums per batch element.

    logits_ref, targets_ref : (1, C, T) VMEM tiles (classes on sublanes,
                              pixels on lanes)
    out_ref                 : (1, 1, T) per-batch lane-parallel partial sums,
                              resident in VMEM across the pixel-tile axis.
    """
    j = pl.program_id(1)

    x = logits_ref[0].astype(jnp.float32)   # (C, T)
    t = targets_ref[0].astype(jnp.float32)  # (C, T)

    # Numerically stable log-sum-exp over the class (sublane) axis.
    m = jnp.max(x, axis=0, keepdims=True)                              # (1, T)
    lse = m + jnp.log(jnp.sum(jnp.exp(x - m), axis=0, keepdims=True))  # (1, T)
    # CE per pixel: sum_c t_c * (lse - x_c)
    per_pixel = jnp.sum((lse - x) * t, axis=0, keepdims=True)          # (1, T)

    # Mask out-of-range lanes of a partial last tile (garbage in padded region
    # is discarded by the select, even if it is NaN/Inf).
    tile = per_pixel.shape[-1]
    lane = jax.lax.broadcasted_iota(jnp.int32, (1, tile), 1) + j * tile
    per_pixel = jnp.where(lane < hw, per_pixel, 0.0)

    @pl.when(j == 0)
    def _init():
        out_ref[...] = jnp.zeros_like(out_ref)

    out_ref[0] += per_pixel


def _pick_tile_hw(hw, c, itemsize):
    """Lane-tile size: ~1 MiB per input per grid step, multiple of 128."""
    target_elems = (1 << 20) // max(1, c * itemsize)
    t = max(128, (target_elems // 128) * 128)
    return hw if hw <= t else t


def segmentation_loss(predictions, targets, *, tile_hw=None):
    """Mean per-pixel softmax cross-entropy.

    predictions : (B, C, H, W) float logits       (NCHW, PyTorch convention)
    targets     : (B, C, H, W) float class probs  (NCHW, PyTorch convention)
    returns     : scalar float32
    """
    B, C, H, W = predictions.shape
    assert targets.shape == predictions.shape
    HW = H * W

    # Free reshape (contiguous memory): pixels on lanes, classes on sublanes.
    logits3 = predictions.reshape(B, C, HW)
    targets3 = targets.reshape(B, C, HW)

    if tile_hw is None:
        itemsize = jnp.dtype(predictions.dtype).itemsize
        tile_hw = _pick_tile_hw(HW, C, itemsize)
    n_tiles = pl.cdiv(HW, tile_hw)

    kernel = functools.partial(_ce_partial_kernel, hw=HW)

    partials = pl.pallas_call(
        kernel,
        out_shape=jax.ShapeDtypeStruct((B, 1, tile_hw), jnp.float32),
        grid_spec=pltpu.PrefetchScalarGridSpec(
            num_scalar_prefetch=0,
            grid=(B, n_tiles),
            in_specs=[
                pl.BlockSpec((1, C, tile_hw), lambda b, j: (b, 0, j)),
                pl.BlockSpec((1, C, tile_hw), lambda b, j: (b, 0, j)),
            ],
            out_specs=pl.BlockSpec((1, 1, tile_hw), lambda b, j: (b, 0, 0)),
        ),
        compiler_params=pltpu.CompilerParams(
            dimension_semantics=("parallel", "arbitrary"),
        ),
    )(logits3, targets3)

    # Tiny final reduce (B * tile_hw f32 elements) done by XLA.
    return jnp.sum(partials) / jnp.float32(B * HW)


def _reference_loss(predictions, targets):
    """Pure-JAX reference for validation."""
    logp = jax.nn.log_softmax(predictions.astype(jnp.float32), axis=1)
    per_pixel = -jnp.sum(targets.astype(jnp.float32) * logp, axis=1)  # (B,H,W)
    return jnp.mean(per_pixel)


if __name__ == "__main__":
    key = jax.random.PRNGKey(0)
    k_pred, k_lbl, k_pred2, k_lbl2 = jax.random.split(key, 4)

    # --- main check: small NCHW shapes -------------------------------------
    B, C, H, W = 2, 4, 16, 16
    predictions = jax.random.normal(k_pred, (B, C, H, W), dtype=jnp.float32)
    labels = jax.random.randint(k_lbl, (B, H, W), 0, C)
    targets = jnp.transpose(
        jax.nn.one_hot(labels, C, dtype=jnp.float32), (0, 3, 1, 2)
    )

    loss = jax.block_until_ready(segmentation_loss(predictions, targets))
    ref = jax.block_until_ready(_reference_loss(predictions, targets))
    assert np.allclose(np.asarray(loss), np.asarray(ref), rtol=1e-5, atol=1e-5), (
        loss,
        ref,
    )

    # --- ragged check: H*W not a multiple of the tile (masked last tile) ---
    B2, C2, H2, W2 = 2, 4, 17, 17   # HW = 289
    predictions2 = jax.random.normal(k_pred2, (B2, C2, H2, W2), dtype=jnp.float32)
    labels2 = jax.random.randint(k_lbl2, (B2, H2, W2), 0, C2)
    targets2 = jnp.transpose(
        jax.nn.one_hot(labels2, C2, dtype=jnp.float32), (0, 3, 1, 2)
    )

    loss2 = jax.block_until_ready(
        segmentation_loss(predictions2, targets2, tile_hw=128)
    )
    ref2 = jax.block_until_ready(_reference_loss(predictions2, targets2))
    assert np.allclose(np.asarray(loss2), np.asarray(ref2), rtol=1e-5, atol=1e-5), (
        loss2,
        ref2,
    )

    print("KERNEL_OK")
</pallas_src>

<mosaic_0001>
module attributes {stable_mosaic.version = 11 : i64} {
  func.func @_ce_partial_kernel(%arg0: i32, %arg1: i32, %arg2: memref<1x4x256xf32, #tpu.memory_space<vmem>>, %arg3: memref<1x4x256xf32, #tpu.memory_space<vmem>>, %arg4: memref<1x1x256xf32, #tpu.memory_space<vmem>>) attributes {dimension_semantics = [#tpu.dimension_semantics<parallel>, #tpu.dimension_semantics<arbitrary>], iteration_bounds = array<i64: 2, 1>, scalar_prefetch = 0 : i64, scratch_operands = 0 : i64, tpu.core_type = #tpu.core_type<tc>, window_params = [{transform_indices = @transform_0, window_bounds = array<i64: 1, 4, 256>}, {transform_indices = @transform_1, window_bounds = array<i64: 1, 4, 256>}, {transform_indices = @transform_2, window_bounds = array<i64: 1, 1, 256>}]} {
    %c0 = arith.constant 0 : index
    %c0_0 = arith.constant 0 : index
    %c0_1 = arith.constant 0 : index
    %0 = vector.load %arg2[%c0, %c0_0, %c0_1] : memref<1x4x256xf32, #tpu.memory_space<vmem>>, vector<1x4x256xf32>
    %1 = vector.shape_cast %0 : vector<1x4x256xf32> to vector<4x256xf32>
    %c0_2 = arith.constant 0 : index
    %c0_3 = arith.constant 0 : index
    %c0_4 = arith.constant 0 : index
    %2 = vector.load %arg3[%c0_2, %c0_3, %c0_4] : memref<1x4x256xf32, #tpu.memory_space<vmem>>, vector<1x4x256xf32>
    %3 = vector.shape_cast %2 : vector<1x4x256xf32> to vector<4x256xf32>
    %cst = arith.constant dense<0xFF800000> : vector<256xf32>
    %4 = vector.multi_reduction <maximumf>, %1, %cst [0] : vector<4x256xf32> to vector<256xf32>
    %5 = vector.shape_cast %4 : vector<256xf32> to vector<1x256xf32>
    %6 = vector.broadcast %5 : vector<1x256xf32> to vector<4x256xf32>
    %7 = arith.subf %1, %6 : vector<4x256xf32>
    %8 = math.exp %7 : vector<4x256xf32>
    %cst_5 = arith.constant dense<0.000000e+00> : vector<256xf32>
    %9 = vector.multi_reduction <add>, %8, %cst_5 [0] : vector<4x256xf32> to vector<256xf32>
    %10 = vector.shape_cast %9 : vector<256xf32> to vector<1x256xf32>
    %11 = math.log %10 : vector<1x256xf32>
    %12 = arith.addf %5, %11 : vector<1x256xf32>
    %13 = vector.broadcast %12 : vector<1x256xf32> to vector<4x256xf32>
    %14 = arith.subf %13, %1 : vector<4x256xf32>
    %15 = arith.mulf %14, %3 : vector<4x256xf32>
    %cst_6 = arith.constant dense<0.000000e+00> : vector<256xf32>
    %16 = vector.multi_reduction <add>, %15, %cst_6 [0] : vector<4x256xf32> to vector<256xf32>
    %17 = vector.shape_cast %16 : vector<256xf32> to vector<1x256xf32>
    %18 = tpu.iota {dimensions = array<i32: 1>} : vector<1x256xi32>
    %c256_i32 = arith.constant 256 : i32
    %19 = arith.muli %arg1, %c256_i32 : i32
    %20 = vector.broadcast %19 : i32 to vector<1x256xi32>
    %21 = arith.addi %18, %20 : vector<1x256xi32>
    %c256_i32_7 = arith.constant 256 : i32
    %22 = vector.broadcast %c256_i32_7 : i32 to vector<1x256xi32>
    %23 = arith.cmpi slt, %21, %22 : vector<1x256xi32>
    %cst_8 = arith.constant 0.000000e+00 : f32
    %24 = vector.broadcast %cst_8 : f32 to vector<1x256xf32>
    %25 = arith.select %23, %17, %24 : vector<1x256xi1>, vector<1x256xf32>
    %c0_i32 = arith.constant 0 : i32
    %26 = arith.cmpi eq, %arg1, %c0_i32 : i32
    %27 = arith.extui %26 : i1 to i32
    %c0_i32_9 = arith.constant 0 : i32
    %28 = arith.cmpi ne, %27, %c0_i32_9 : i32
    scf.if %28 {
      %cst_16 = arith.constant 0.000000e+00 : f32
      %35 = vector.broadcast %cst_16 : f32 to vector<1x1x256xf32>
      %c0_17 = arith.constant 0 : index
      %c0_18 = arith.constant 0 : index
      %c0_19 = arith.constant 0 : index
      %36 = vector.load %arg4[%c0_17, %c0_18, %c0_19] : memref<1x1x256xf32, #tpu.memory_space<vmem>>, vector<1x1x256xf32>
      tpu.vector_store %arg4[%c0_17, %c0_18, %c0_19], %35 {strides = array<i32>} : memref<1x1x256xf32, #tpu.memory_space<vmem>>, vector<1x1x256xf32>,
    } else {
    }
    %c0_10 = arith.constant 0 : index
    %c0_11 = arith.constant 0 : index
    %c0_12 = arith.constant 0 : index
    %29 = vector.load %arg4[%c0_10, %c0_11, %c0_12] : memref<1x1x256xf32, #tpu.memory_space<vmem>>, vector<1x1x256xf32>
    %30 = vector.shape_cast %29 : vector<1x1x256xf32> to vector<1x256xf32>
    %31 = arith.addf %30, %25 : vector<1x256xf32>
    %c0_13 = arith.constant 0 : index
    %c0_14 = arith.constant 0 : index
    %c0_15 = arith.constant 0 : index
    %32 = vector.load %arg4[%c0_13, %c0_14, %c0_15] : memref<1x1x256xf32, #tpu.memory_space<vmem>>, vector<1x1x256xf32>
    %33 = vector.shape_cast %32 : vector<1x1x256xf32> to vector<1x256xf32>
    %34 = vector.shape_cast %31 : vector<1x256xf32> to vector<1x1x256xf32>
    tpu.vector_store %arg4[%c0_13, %c0_14, %c0_15], %34 {strides = array<i32>} : memref<1x1x256xf32, #tpu.memory_space<vmem>>, vector<1x1x256xf32>,
    return
  }
  func.func @transform_0(%arg0: i32, %arg1: i32) -> (i32, i32, i32) {
    %c0_i32 = arith.constant 0 : i32
    %c0_i32_0 = arith.constant 0 : i32
    return %arg0, %c0_i32, %arg1 : i32, i32, i32
  }
  func.func @transform_1(%arg0: i32, %arg1: i32) -> (i32, i32, i32) {
    %c0_i32 = arith.constant 0 : i32
    %c0_i32_0 = arith.constant 0 : i32
    return %arg0, %c0_i32, %arg1 : i32, i32, i32
  }
  func.func @transform_2(%arg0: i32, %arg1: i32) -> (i32, i32, i32) {
    %c0_i32 = arith.constant 0 : i32
    %c0_i32_0 = arith.constant 0 : i32
    %c0_i32_1 = arith.constant 0 : i32
    return %arg0, %c0_i32, %c0_i32_0 : i32, i32, i32
  }
}

</mosaic_0001>

<llo_original>
// kernel: tpu_custom_call.1
$region0: #{tpu_custom_call.1}
  #allocation0 [shape = 'u32[]', space=smem, size = 0x4, offset = 0x4, fixed_abs, tag = 'smem constant byte address 0x4 - core index']
  #allocation1 [shape = 'u32[72,128]{1,0:T(1,128)}', space=vmem, size = 0x9000, scoped, tag = 'internal scratch']
  %s0 = inlined_call_operand.hbm [shape: f32[2,4,256], index: 0, kind: input, shape index: {}]
  %s1 = inlined_call_operand.hbm [shape: f32[2,4,256], index: 1, kind: input, shape index: {}]
  %s2 = inlined_call_operand.hbm [shape: f32[2,1,256], index: 2, kind: output, shape index: {}]
  %s3 = sld [smem:[#allocation0]]
  $region53: #{tpu_custom_call.1} parent=0
    _
  %s5 = ssub.s32 1, %s3
  %s6 = scalar_select 0, %s5, %s3
  $region1: #{tpu_custom_call.1} parent=0
    #allocation2 [shape = 'u8[8192]{0}', space=vmem, size = 0x2000, scoped, tag = 'input window, operand 0']
    #allocation3 [shape = 's32[2]{0}', space=sflag, size = 0x8, scoped, tag = 'scoped memory for tpu_custom_call.1']
    #allocation4 [shape = 's32[2]{0}', space=sflag, size = 0x8, scoped, tag = 'scoped memory for tpu_custom_call.1']
    #allocation5 [shape = 'u8[8192]{0}', space=vmem, size = 0x2000, scoped, tag = 'input window, operand 1']
    #allocation6 [shape = 's32[2]{0}', space=sflag, size = 0x8, scoped, tag = 'scoped memory for tpu_custom_call.1']
    #allocation7 [shape = 'u8[2048]{0}', space=vmem, size = 0x800, scoped, tag = 'output window, operand 0']
    %7 = vsyncpa [#allocation3], 0
    %s8 = scalar_lea.sflag [#allocation3], 1
    %9 = vsyncpa %s8, 0
    %10 = vsyncpa [#allocation6], 0
    %s11 = scalar_lea.sflag [#allocation6], 1
    %12 = vsyncpa %s11, 0
    %13 = vsyncpa [#allocation4], 0
    %s14 = scalar_lea.sflag [#allocation4], 1
    %15 = vsyncpa %s14, 0
    loop: start=0, step=1, limit=4
    $region2: #{tpu_custom_call.1} parent=1 // loop_pre_header
      _
    $region3: #{tpu_custom_call.1} parent=1 // loop_header
      %s17 = sphi 0, %s21
      %p18 = scmp.ge.s32.totalorder %s17, 4
      %s24 = sphi 0, %s36
      %s25 = sphi 0, %s32
      %s26 = sphi 0, %s24
      %s27 = sphi 0, %s25
      %s28 = sphi 0, %s26
      %s29 = sphi 0, %s27
      %s41 = sphi 0, %s43
      %s44 = sphi 0, %s41
      %s45 = sphi 0, %s44
      %s61 = sphi 0, %s45
      %s69 = sphi 0, %s71
      %s72 = sphi 0, %s69
      %s73 = sphi 0, %s72
      %s89 = sphi 0, %s73
      %s95 = sphi 0, %s97
      %s98 = sphi 0, %s95
      %s99 = sphi 0, %s98
      %s115 = sphi 0, %s99
    $region4: #{tpu_custom_call.1} parent=1 // loop_header_branch
      %20 = sbr.rel (%p18) target = $region8
    $region5: #{tpu_custom_call.1} parent=1 // loop_body
      %s22 = ssub.s32 %s17, 1
      %s23 = ssub.s32 %s17, 2
      %s30 = sadd.s32 1, %s25
      %p31 = scmp.ge.s32.totalorder %s30, 1
      %s32 = scalar_select %p31, 0, %s30
      %s33 = sadd.s32 1, %s24
      %s34 = scalar_select %p31, %s33, %s24
      %p35 = scmp.ge.s32.totalorder %s34, 2
      %s36 = scalar_select %p35, 0, %s34
      %s37 = ssub.s32 %s24, %s36
      %s38 = ssub.s32 %s25, %s32
      %s39 = sor.u32 %s37, %s38
      %p40 = scmp.eq.s32.totalorder %s39, 0
      %s42 = sadd.s32 %s41, 1
      %s43 = scalar_select %p40, %s41, %s42
      %p46 = pneg %p40
      %p47 = scmp.eq.s32.totalorder %s17, 1
      %p48 = por %p46, %p47
      %p49 = scmp.ne.s32.totalorder %s41, %s44
      %p50 = scmp.eq.s32.totalorder %s17, 0
      %p51 = por %p49, %p50
      %p52 = scmp.ne.s32.totalorder %s41, %s44
      %p53 = scmp.eq.s32.totalorder %s22, 1
      %p54 = por %p52, %p53
      %p55 = scmp.ne.s32.totalorder %s44, %s45
      %p56 = scmp.eq.s32.totalorder %s22, 0
      %p57 = por %p55, %p56
      %p58 = scmp.ne.s32.totalorder %s44, %s45
      %p59 = scmp.eq.s32.totalorder %s23, 1
      %p60 = por %p58, %p59
      %p62 = scmp.ne.s32.totalorder %s45, %s61
      %p63 = scmp.eq.s32.totalorder %s23, 0
      %p64 = por %p62, %p63
      %s65 = ssub.s32 %s24, %s36
      %s66 = ssub.s32 %s25, %s32
      %s67 = sor.u32 %s65, %s66
      %p68 = scmp.eq.s32.totalorder %s67, 0
      %s70 = sadd.s32 %s69, 1
      %s71 = scalar_select %p68, %s69, %s70
      %p74 = pneg %p68
      %p75 = scmp.eq.s32.totalorder %s17, 1
      %p76 = por %p74, %p75
      %p77 = scmp.ne.s32.totalorder %s69, %s72
      %p78 = scmp.eq.s32.totalorder %s17, 0
      %p79 = por %p77, %p78
      %p80 = scmp.ne.s32.totalorder %s69, %s72
      %p81 = scmp.eq.s32.totalorder %s22, 1
      %p82 = por %p80, %p81
      %p83 = scmp.ne.s32.totalorder %s72, %s73
      %p84 = scmp.eq.s32.totalorder %s22, 0
      %p85 = por %p83, %p84
      %p86 = scmp.ne.s32.totalorder %s72, %s73
      %p87 = scmp.eq.s32.totalorder %s23, 1
      %p88 = por %p86, %p87
      %p90 = scmp.ne.s32.totalorder %s73, %s89
      %p91 = scmp.eq.s32.totalorder %s23, 0
      %p92 = por %p90, %p91
      %s93 = ssub.s32 %s24, %s36
      %p94 = scmp.eq.s32.totalorder %s93, 0
      %s96 = sadd.s32 %s95, 1
      %s97 = scalar_select %p94, %s95, %s96
      %p100 = pneg %p94
      %p101 = scmp.eq.s32.totalorder %s17, 1
      %p102 = por %p100, %p101
      %p103 = scmp.ne.s32.totalorder %s95, %s98
      %p104 = scmp.eq.s32.totalorder %s17, 0
      %p105 = por %p103, %p104
      %p106 = scmp.ne.s32.totalorder %s95, %s98
      %p107 = scmp.eq.s32.totalorder %s22, 1
      %p108 = por %p106, %p107
      %p109 = scmp.ne.s32.totalorder %s98, %s99
      %p110 = scmp.eq.s32.totalorder %s22, 0
      %p111 = por %p109, %p110
      %p112 = scmp.ne.s32.totalorder %s98, %s99
      %p113 = scmp.eq.s32.totalorder %s23, 1
      %p114 = por %p112, %p113
      %p116 = scmp.ne.s32.totalorder %s99, %s115
      %p117 = scmp.eq.s32.totalorder %s23, 0
      %p118 = por %p116, %p117
      %p119 = scmp.le.s32.totalorder 1, %s17
      %p120 = scmp.lt.s32.totalorder %s17, 3
      %p121 = pnand %p119, %p120
      %p122 = pneg %p121
      // Predicated region
      $region9: #{tpu_custom_call.1} parent=5 // pred_check
        _
      $region10: #{tpu_custom_call.1} parent=5 // pred_check_branch
        %124 = sbr.rel (%p121) target = $region12
      $region11: #{tpu_custom_call.1} parent=5 // pred_region
        %s125 = ssub.s32 %s17, 1
      $region12: #{tpu_custom_call.1} parent=5 // pred_fallthru
        _
      %p126 = scmp.lt.s32.totalorder %s17, 2
      // Predicated region
      $region13: #{tpu_custom_call.1} parent=5 // pred_check
        %p127 = pneg %p126
      $region14: #{tpu_custom_call.1} parent=5 // pred_check_branch
        %129 = sbr.rel (%p127) target = $region16
      $region15: #{tpu_custom_call.1} parent=5 // pred_region
        // Predicated region
        $region17: #{tpu_custom_call.1} parent=15 // pred_check
          %p130 = pneg %p51
        $region18: #{tpu_custom_call.1} parent=15 // pred_check_branch
          %132 = sbr.rel (%p130) target = $region20
        $region19: #{tpu_custom_call.1} parent=15 // pred_region
          %s133 = sand.u32 %s41, 1
          %s134 = scalar_lea.sflag [#allocation3], %s133
          %s135 = sand.u32 %s41, 1
          %s136 = smul.addr %s135, 8
          %s137 = scalar_lea.vmem [#allocation2], %s136
          %s138 = smul.u32 2, %s25
          %140 = vsyncadd %s134, 0
          %s141 = smul.addr %s24, 2
          %s142 = sadd.s32 %s138, %s141
          %s143 = smul.addr %s142, 4
          %s144 = scalar_lea.hbm %s0, %s143
          %s146 = sshll.u32 %s144, 4
          %s147 = int_to_ptr.hbm [resolvable:$true] %s146
          %s148 = sshll.u32 %s137, 4
          %s149 = int_to_ptr.vmem [resolvable:$true] %s148
          %151 = dma.hbm_to_vmem [thread:$0]  %s147, 128, %s149, %s134
        $region20: #{tpu_custom_call.1} parent=15 // pred_fallthru
          _
        // Predicated region
        $region21: #{tpu_custom_call.1} parent=15 // pred_check
          %p152 = pneg %p79
        $region22: #{tpu_custom_call.1} parent=15 // pred_check_branch
          %154 = sbr.rel (%p152) target = $region24
        $region23: #{tpu_custom_call.1} parent=15 // pred_region
          %s155 = sand.u32 %s69, 1
          %s156 = scalar_lea.sflag [#allocation6], %s155
          %s157 = sand.u32 %s69, 1
          %s158 = smul.addr %s157, 8
          %s159 = scalar_lea.vmem [#allocation5], %s158
          %s160 = smul.u32 2, %s25
          %162 = vsyncadd %s156, 0
          %s163 = smul.addr %s24, 2
          %s164 = sadd.s32 %s160, %s163
          %s165 = smul.addr %s164, 4
          %s166 = scalar_lea.hbm %s1, %s165
          %s168 = sshll.u32 %s166, 4
          %s169 = int_to_ptr.hbm [resolvable:$true] %s168
          %s170 = sshll.u32 %s159, 4
          %s171 = int_to_ptr.vmem [resolvable:$true] %s170
          %173 = dma.hbm_to_vmem [thread:$0]  %s169, 128, %s171, %s156
        $region24: #{tpu_custom_call.1} parent=15 // pred_fallthru
          _
      $region16: #{tpu_custom_call.1} parent=5 // pred_fallthru
        _
      %p174 = scmp.le.s32.totalorder 1, %s17
      %p175 = scmp.lt.s32.totalorder %s17, 3
      %p176 = pnand %p174, %p175
      %p177 = pneg %p176
      // Predicated region
      $region25: #{tpu_custom_call.1} parent=5 // pred_check
        _
      $region26: #{tpu_custom_call.1} parent=5 // pred_check_branch
        %179 = sbr.rel (%p176) target = $region28
      $region27: #{tpu_custom_call.1} parent=5 // pred_region
        %s180 = ssub.s32 %s17, 1
        %s181 = sand.u32 %s44, 1
        %s182 = scalar_lea.sflag [#allocation3], %s181
        %s183 = sand.u32 %s44, 1
        %s184 = smul.addr %s183, 8
        %s185 = scalar_lea.vmem [#allocation2], %s184
        // Predicated region
        $region29: #{tpu_custom_call.1} parent=27 // pred_check
          %p186 = pneg %p57
        $region30: #{tpu_custom_call.1} parent=27 // pred_check_branch
          %188 = sbr.rel (%p186) target = $region32
        $region31: #{tpu_custom_call.1} parent=27 // pred_region
          %190 = dma.done %s182, 128
        $region32: #{tpu_custom_call.1} parent=27 // pred_fallthru
          _
        %s191 = sand.u32 %s72, 1
        %s192 = scalar_lea.sflag [#allocation6], %s191
        %s193 = sand.u32 %s72, 1
        %s194 = smul.addr %s193, 8
        %s195 = scalar_lea.vmem [#allocation5], %s194
        // Predicated region
        $region33: #{tpu_custom_call.1} parent=27 // pred_check
          %p196 = pneg %p85
        $region34: #{tpu_custom_call.1} parent=27 // pred_check_branch
          %198 = sbr.rel (%p196) target = $region36
        $region35: #{tpu_custom_call.1} parent=27 // pred_region
          %200 = dma.done %s192, 128
        $region36: #{tpu_custom_call.1} parent=27 // pred_fallthru
          _
        %s201 = sand.u32 %s44, 1
        %s202 = scalar_lea.sflag [#allocation3], %s201
        %s203 = sand.u32 %s44, 1
        %s204 = smul.addr %s203, 8
        %s205 = scalar_lea.vmem [#allocation2], %s204
        %p206 = pneg %p57
        %p207 = pneg %p54
        %s208 = sand.u32 %s72, 1
        %s209 = scalar_lea.sflag [#allocation6], %s208
        %s210 = sand.u32 %s72, 1
        %s211 = smul.addr %s210, 8
        %s212 = scalar_lea.vmem [#allocation5], %s211
        %p213 = pneg %p85
        %p214 = pneg %p82
        %p215 = pneg %p111
        %p216 = pneg %p108
        %s217 = sand.u32 %s98, 1
        %s218 = scalar_lea.sflag [#allocation4], %s217
        %s219 = sand.u32 %s98, 1
        %s220 = smul.addr %s219, 2
        %s221 = scalar_lea.vmem [#allocation7], %s220
        %s222 = smul.u32 2, %s27
        %s223 = smul.u32 2, %s27
        %v224 = vld [vmem:[%s185] sm:$0xff]
        %v225 = vld [vmem:[%s195] sm:$0xff]
        %227 = vst [vmem:[#allocation1] ss:$2 sm:$0xff] %v224
        %v228 = vld.sshfl [vmem:[#allocation1] sm:$0xff pattern:$0x75316420]
        %v229 = vld.sshfl [vmem:[#allocation1 + $0x8] sm:$0xff pattern:$0x75316420]
        %vm232 = vcmask 1043456
        %v233 = vsel %vm232, %v228, -inf
        %v234 = vrot.slane %v233, 4
        %v235 = vmax.f32 %v233, %v234
        %v236 = vrot.slane %v235, 2
        %v237 = vmax.f32 %v235, %v236
        %v238 = vrot.slane %v237, 1
        %v239 = vmax.f32 %v237, %v238
        %v240 = vsel %vm232, %v229, -inf
        %v241 = vrot.slane %v240, 4
        %v242 = vmax.f32 %v240, %v241
        %v243 = vrot.slane %v242, 2
        %v244 = vmax.f32 %v242, %v243
        %v245 = vrot.slane %v244, 1
        %v246 = vmax.f32 %v244, %v245
        %v249 = vrot.slane %v246, 4
        %v250 = vsel %vm232, %v239, %v249
        %v252 = vsub.f32 %v224, %v250
        %v253 = vmul.f32 %v252, 1.442695
        %v254 = vpow.pop %v253
        %256 = vst [vmem:[#allocation1] ss:$2 sm:$0xff] %v254
        %v257 = vld.sshfl [vmem:[#allocation1] sm:$0xff pattern:$0x75316420]
        %v258 = vld.sshfl [vmem:[#allocation1 + $0x8] sm:$0xff pattern:$0x75316420]
        %v261 = vsel %vm232, %v257, 0.0
        %v262 = vrot.slane %v261, 4
        %v263 = vadd.f32 %v261, %v262
        %v264 = vrot.slane %v263, 2
        %v265 = vadd.f32 %v263, %v264
        %v266 = vrot.slane %v265, 1
        %v267 = vadd.f32 %v265, %v266
        %v268 = vsel %vm232, %v258, 0.0
        %v269 = vrot.slane %v268, 4
        %v270 = vadd.f32 %v268, %v269
        %v271 = vrot.slane %v270, 2
        %v272 = vadd.f32 %v270, %v271
        %v273 = vrot.slane %v272, 1
        %v274 = vadd.f32 %v272, %v273
        %v275 = vlog2.pop %v267
        %v276 = vmul.f32 %v275, 0.6931472
        %v277 = vlog2.pop %v274
        %v278 = vmul.f32 %v277, 0.6931472
        %v279 = vadd.f32 %v239, %v276
        %v280 = vadd.f32 %v246, %v278
        %281 = vst [vmem:[#allocation1] ss:$2 sm:$0xff] %v224
        %v282 = vld.sshfl [vmem:[#allocation1] sm:$0xff pattern:$0x75316420]
        %v283 = vld.sshfl [vmem:[#allocation1 + $0x8] sm:$0xff pattern:$0x75316420]
        %v286 = vsub.f32 %v279, %v282
        %v287 = vsub.f32 %v280, %v283
        %289 = vst [vmem:[#allocation1] ss:$2 sm:$0xff] %v225
        %v290 = vld.sshfl [vmem:[#allocation1] sm:$0xff pattern:$0x75316420]
        %v291 = vld.sshfl [vmem:[#allocation1 + $0x8] sm:$0xff pattern:$0x75316420]
        %v294 = vmul.f32 %v286, %v290
        %v295 = vmul.f32 %v287, %v291
        %v296 = vsel %vm232, %v294, 0.0
        %v297 = vrot.slane %v296, 4
        %v298 = vadd.f32 %v296, %v297
        %v299 = vrot.slane %v298, 2
        %v300 = vadd.f32 %v298, %v299
        %v301 = vrot.slane %v300, 1
        %v302 = vadd.f32 %v300, %v301
        %v303 = vsel %vm232, %v295, 0.0
        %v304 = vrot.slane %v303, 4
        %v305 = vadd.f32 %v303, %v304
        %v306 = vrot.slane %v305, 2
        %v307 = vadd.f32 %v305, %v306
        %v308 = vrot.slane %v307, 1
        %v309 = vadd.f32 %v307, %v308
        %v310 = vlaneseq
        %v311 = vand.u32 %v310, 127
        %v312 = vadd.s32 %v311, 128
        %s313 = smul.u32 %s27, 256
        %v314 = vstv %s313
        %v315 = vadd.s32 %v311, %v314
        %v316 = vadd.s32 %v312, %v314
        %vm317 = vcmp.lt.s32.totalorder %v315, 256
        %vm318 = vcmp.lt.s32.totalorder %v316, 256
        %v319 = vsel %vm317, %v302, 0.0
        %v320 = vsel %vm318, %v309, 0.0
        %p321 = scmp.eq.s32.totalorder %s27, 0
        // Predicated region
        $region37: #{tpu_custom_call.1} parent=27 // pred_check
          %p322 = pneg %p321
        $region38: #{tpu_custom_call.1} parent=27 // pred_check_branch
          %324 = sbr.rel (%p322) target = $region40
        $region39: #{tpu_custom_call.1} parent=27 // pred_region
          %v325 = vlaneseq
          %vm326 = vcmp.ge.s32.totalorder %v325, 0
          %vm327 = vcmp.lt.s32.totalorder %v325, 256
          %vm328 = vmand %vm326, %vm327
          %329 = vst.msk [vmem:[%s221] sm:$0x3] %vm328, 0.0
        $region40: #{tpu_custom_call.1} parent=27 // pred_fallthru
          _
        %v330 = vld [vmem:[%s221] sm:$0x3]
        %v333 = vrot.slane %v320, 7
        %vm334 = vcmask 1040384
        %v335 = vsel %vm334, %v319, %v333
        %v337 = vadd.f32 %v330, %v335
        %v338 = vlaneseq
        %vm339 = vcmp.ge.s32.totalorder %v338, 0
        %vm340 = vcmp.lt.s32.totalorder %v338, 256
        %vm341 = vmand %vm339, %vm340
        %342 = vst.msk [vmem:[%s221] sm:$0x3] %vm341, %v337
        %s343 = sand.u32 %s98, 1
        %s344 = scalar_lea.sflag [#allocation4], %s343
        %s345 = sand.u32 %s98, 1
        %s346 = smul.addr %s345, 2
        %s347 = scalar_lea.vmem [#allocation7], %s346
        // Predicated region
        $region41: #{tpu_custom_call.1} parent=27 // pred_check
          %p348 = pneg %p108
        $region42: #{tpu_custom_call.1} parent=27 // pred_check_branch
          %350 = sbr.rel (%p348) target = $region44
        $region43: #{tpu_custom_call.1} parent=27 // pred_region
          %352 = vsyncadd %s344, 0
          %s353 = smul.addr %s26, 2
          %s354 = scalar_lea.hbm %s2, %s353
          %s356 = sshll.u32 %s347, 4
          %s357 = int_to_ptr.vmem [resolvable:$true] %s356
          %s358 = sshll.u32 %s354, 4
          %s359 = int_to_ptr.hbm [resolvable:$true] %s358
          %361 = dma.vmem_to_hbm [thread:$0]  %s357, 32, %s359, %s344
        $region44: #{tpu_custom_call.1} parent=27 // pred_fallthru
          _
      $region28: #{tpu_custom_call.1} parent=5 // pred_fallthru
        _
      %p362 = scmp.le.s32.totalorder 2, %s17
      // Predicated region
      $region45: #{tpu_custom_call.1} parent=5 // pred_check
        %p363 = pneg %p362
      $region46: #{tpu_custom_call.1} parent=5 // pred_check_branch
        %365 = sbr.rel (%p363) target = $region48
      $region47: #{tpu_custom_call.1} parent=5 // pred_region
        %s366 = ssub.s32 %s17, 2
        // Predicated region
        $region49: #{tpu_custom_call.1} parent=47 // pred_check
          %p367 = pneg %p114
        $region50: #{tpu_custom_call.1} parent=47 // pred_check_branch
          %369 = sbr.rel (%p367) target = $region52
        $region51: #{tpu_custom_call.1} parent=47 // pred_region
          %s370 = sand.u32 %s99, 1
          %s371 = scalar_lea.sflag [#allocation4], %s370
          %s372 = sand.u32 %s99, 1
          %s373 = smul.addr %s372, 2
          %s374 = scalar_lea.vmem [#allocation7], %s373
          %376 = dma.done %s371, 32
        $region52: #{tpu_custom_call.1} parent=47 // pred_fallthru
          _
      $region48: #{tpu_custom_call.1} parent=5 // pred_fallthru
        _
    $region6: #{tpu_custom_call.1} parent=1 // loop_footer
      %s21 = sadd.s32 1, %s17
    $region7: #{tpu_custom_call.1} parent=1 // loop_footer_branch
      %16 = sbr.rel target = $region3
    $region8: #{tpu_custom_call.1} parent=1 // loop_exit
      _
    %377 = vsyncpa [#allocation3], 1
    %s378 = scalar_lea.sflag [#allocation3], 1
    %379 = vsyncpa %s378, 1
    %380 = vsyncpa [#allocation6], 1
    %s381 = scalar_lea.sflag [#allocation6], 1
    %382 = vsyncpa %s381, 1
    %383 = vsyncpa [#allocation4], 1
    %s384 = scalar_lea.sflag [#allocation4], 1
    %385 = vsyncpa %s384, 1

</llo_original>
